<compile_context>
chip_gen: v6e
topology: v6e:2x2x1
jax: 0.10.0
libtpu: 0.0.40
codegen_flags: <defaults>
</compile_context>

<pallas_src>
import functools

import jax
import jax.numpy as jnp
from jax import lax
from jax.experimental import pallas as pl
from jax.experimental.pallas import tpu as pltpu


_VMEM_LIMIT = 48 * 1024 * 1024  # explicit scoped VMEM; headroom on v7x (64 MiB phys)


def _pick_tile(hw, batch, max_tile=32768):
    """Lane tile for the head kernel.

    Largest 128-multiple tile that divides hw, capped at max_tile (head is
    HBM/step-overhead bound, so bigger is better).  If batch == 1 and a single
    tile would cover everything, split in two so the grid still has >= 2
    "parallel" blocks for v7x's two TensorCores.
    """
    if hw <= max_tile:
        t = hw
    else:
        t = (max_tile // 128) * 128
        while t >= 128 and hw % t:
            t -= 128
        if t < 128:
            t = hw
    if batch == 1 and t == hw and hw % 256 == 0:
        t = hw // 2
    return t


# --------------------------------------------------------------------------
# Shared head math: y = head(relu(W1 @ x + b1)), sigmoid on class channels.
# Channels live on the sublane axis, flattened pixels are lane-dense.
# --------------------------------------------------------------------------
def _head_math(x, w1, b1, w2, b2, num_classes):
    h = jnp.dot(w1, x, preferred_element_type=jnp.float32)
    h = jnp.maximum(h + b1, 0.0)                                   # backbone ReLU
    y = jnp.dot(w2, h, preferred_element_type=jnp.float32) + b2
    ch = lax.broadcasted_iota(jnp.int32, y.shape, 0)
    # sigmoid on the class-heatmap channels, raw regression channels.
    return jnp.where(ch < num_classes, jax.nn.sigmoid(y), y)


# --------------------------------------------------------------------------
# Fused backbone + head kernel (points output path)
# --------------------------------------------------------------------------
def _head_kernel(x_ref, w1_ref, b1_ref, w2_ref, b2_ref, o_ref, *, num_classes):
    o_ref[...] = _head_math(x_ref[...], w1_ref[...], b1_ref[...][:, :1],
                            w2_ref[...], b2_ref[...][:, :1], num_classes)


def fused_backbone_head(x_flat, w1, b1, w2, b2, *, num_classes, max_tile=32768):
    B, c_in, HW = x_flat.shape
    c1 = w1.shape[0]
    c2 = w2.shape[0]
    TM = _pick_tile(HW, B, max_tile)
    grid = (B, HW // TM)
    return pl.pallas_call(
        functools.partial(_head_kernel, num_classes=num_classes),
        out_shape=jax.ShapeDtypeStruct((B, c2, HW), jnp.float32),
        grid=grid,
        in_specs=[
            pl.BlockSpec((None, c_in, TM), lambda b, m: (b, 0, m)),
            pl.BlockSpec((c1, c_in), lambda b, m: (0, 0)),
            pl.BlockSpec((c1, 128), lambda b, m: (0, 0)),
            pl.BlockSpec((c2, c1), lambda b, m: (0, 0)),
            pl.BlockSpec((c2, 128), lambda b, m: (0, 0)),
        ],
        out_specs=pl.BlockSpec((None, c2, TM), lambda b, m: (b, 0, m)),
        compiler_params=pltpu.CompilerParams(
            dimension_semantics=("parallel", "parallel"),
            vmem_limit_bytes=_VMEM_LIMIT),
    )(x_flat, w1, b1, w2, b2)


# --------------------------------------------------------------------------
# Fused backbone + head + PointsNonMaxSuppression (kernel_size = 3) kernel.
# return_objects path: the (B, C, HW) points tensor never touches HBM.
# --------------------------------------------------------------------------
def _head_nms_kernel(x_ref, w1_ref, b1_ref, w2_ref, b2_ref, o_ref,
                     *, num_classes, H, W):
    HW = H * W
    pts = _head_math(x_ref[...], w1_ref[...], b1_ref[...][:, :1],
                     w2_ref[...], b2_ref[...][:, :1], num_classes)   # (C, HW)
    probs = jnp.max(pts[:num_classes], axis=0, keepdims=True)        # (1, HW)

    f = lax.broadcasted_iota(jnp.int32, (1, HW), 1)
    col = f % W                                                      # oj
    row = f // W                                                     # oi

    def nbr(a, b):
        # N[a][b][oi*W + oj] = probs[oi+a, oj+b], zero outside the image.
        if a == 0 and b == 0:
            return probs
        v = pltpu.roll(probs, shift=HW - (a * W + b), axis=1)        # XLU rotate
        if b:
            v = jnp.where(col + b < W, v, 0.0)                       # column wrap
        if a:
            v = jnp.where(row + a < H, v, 0.0)                       # row wrap
        return v

    n00 = nbr(0, 0); n01 = nbr(0, 1); n02 = nbr(0, 2)
    n10 = nbr(1, 0); n11 = nbr(1, 1); n12 = nbr(1, 2)
    n20 = nbr(2, 0); n21 = nbr(2, 1); n22 = nbr(2, 2)

    # Full 3x3 window (every column but the last): torch.argmax == flat index 4
    # -> strictly greater than earlier flat indices, >= later ones.
    c = n11
    hi = jnp.maximum(jnp.maximum(n00, n01), jnp.maximum(n02, n10))
    lo = jnp.maximum(jnp.maximum(n12, n20), jnp.maximum(n21, n22))
    keep_full = (c > hi) & (c >= lo)
    # Last column: window truncated to 3x2, flat index 4 = window element (2,0).
    d = n20
    hi_last = jnp.maximum(jnp.maximum(n00, n01), jnp.maximum(n10, n11))
    keep_last = (d > hi_last) & (d >= n21)

    keep = jnp.where(col == W - 1, keep_last, keep_full)
    # Last row: window truncated to 2 rows; flat index 4 lands on zero padding
    # and can never be a strict first maximum -> never kept.
    keep = keep & (row < H - 1)

    o_ref[...] = jnp.where(keep, pts, 0.0)


def fused_backbone_head_nms(x_flat, w1, b1, w2, b2, *, num_classes, H, W):
    # TODO(synk): for large heatmaps (>~256x256) tile the HW axis with a 2*W+2
    # halo (and chunk the in-kernel NMS) to bound VMEM and vreg pressure.
    B, c_in, HW = x_flat.shape
    c1 = w1.shape[0]
    c2 = w2.shape[0]
    return pl.pallas_call(
        functools.partial(_head_nms_kernel, num_classes=num_classes, H=H, W=W),
        out_shape=jax.ShapeDtypeStruct((B, c2, HW), jnp.float32),
        grid=(B,),
        in_specs=[
            pl.BlockSpec((None, c_in, HW), lambda b: (b, 0, 0)),
            pl.BlockSpec((c1, c_in), lambda b: (0, 0)),
            pl.BlockSpec((c1, 128), lambda b: (0, 0)),
            pl.BlockSpec((c2, c1), lambda b: (0, 0)),
            pl.BlockSpec((c2, 128), lambda b: (0, 0)),
        ],
        out_specs=pl.BlockSpec((None, c2, HW), lambda b: (b, 0, 0)),
        compiler_params=pltpu.CompilerParams(
            dimension_semantics=("parallel",),
            vmem_limit_bytes=_VMEM_LIMIT),
    )(x_flat, w1, b1, w2, b2)


# --------------------------------------------------------------------------
# PointsToObjects + ScaleObjects (tiny decode, plain JAX)
# --------------------------------------------------------------------------
def points_to_objects_and_scale(points_flat, H, W, top_k=8, scale=4):
    # TODO(synk): PointsToObjects source was not provided; this is a plain-JAX
    # top-k decode stand-in producing (B, N, 6) = [x, y, reg0, reg1, score, cls].
    # ScaleObjects (x scale on the first four columns) is folded in here.
    B, C, HW = points_flat.shape
    nc = C - 4
    heat = points_flat[:, :nc].reshape(B, nc * HW)
    scores, idx = lax.top_k(heat, top_k)
    cls = (idx // HW).astype(jnp.float32)
    rem = idx % HW
    ys = (rem // W).astype(jnp.float32)
    xs = (rem % W).astype(jnp.float32)
    reg = jnp.take_along_axis(
        points_flat[:, nc:, :],
        jnp.broadcast_to(rem[:, None, :], (B, 4, top_k)), axis=2)    # (B, 4, K)
    s = float(scale)
    return jnp.stack(
        [xs * s, ys * s, reg[:, 0] * s, reg[:, 1] * s, scores, cls], axis=-1)


# --------------------------------------------------------------------------
# CenterNet
# --------------------------------------------------------------------------
class CenterNetPallas:
    NUM_CLASSES = 4
    FEAT = 16
    OUT_CH = NUM_CLASSES + 4

    def __init__(self, key):
        # TODO(synk): ResnetBackbone / CenterNetHead sources were not provided;
        # they are stood in by deterministic 1x1-conv layers with the CenterNet
        # output convention (NUM_CLASSES heatmap channels + 4 regression channels).
        k1, k2, k3, k4 = jax.random.split(key, 4)
        self.w1 = 0.1 * jax.random.normal(k1, (self.FEAT, 3), jnp.float32)
        self.w2 = 0.1 * jax.random.normal(k3, (self.OUT_CH, self.FEAT), jnp.float32)
        # Biases pre-broadcast to lane-dense (c, 128) blocks (aligned loads).
        b1 = 0.01 * jax.random.normal(k2, (self.FEAT, 1), jnp.float32)
        b2 = 0.01 * jax.random.normal(k4, (self.OUT_CH, 1), jnp.float32)
        self.b1 = jnp.tile(b1, (1, 128))
        self.b2 = jnp.tile(b2, (1, 128))

    def __call__(self, input_t, return_objects=False):
        B, c_in, H, W = input_t.shape
        x_flat = input_t.reshape(B, c_in, H * W)   # NCHW -> (B, C, H*W), no transpose
        if not return_objects:
            pts = fused_backbone_head(
                x_flat, self.w1, self.b1, self.w2, self.b2,
                num_classes=self.NUM_CLASSES)
            return pts.reshape(B, self.OUT_CH, H, W)
        # PointsNonMaxSuppression fused into the head kernel: no HBM round trip.
        # TODO(synk): only the module-default nms kernel_size=3 is implemented.
        pts = fused_backbone_head_nms(
            x_flat, self.w1, self.b1, self.w2, self.b2,
            num_classes=self.NUM_CLASSES, H=H, W=W)
        # PointsToObjects + ScaleObjects (scale folded into the decode).
        return points_to_objects_and_scale(pts, H, W, top_k=8, scale=4)


if __name__ == "__main__":
    key = jax.random.PRNGKey(0)
    k_param, k_input = jax.random.split(key)
    model = CenterNetPallas(k_param)
    x = jax.random.normal(k_input, (2, 3, 16, 16), jnp.float32)

    points_fn = jax.jit(lambda inp: model(inp, return_objects=False))
    objects_fn = jax.jit(lambda inp: model(inp, return_objects=True))

    points = points_fn(x)       # (2, 8, 16, 16)
    objects = objects_fn(x)     # (2, 8, 6)
    jax.block_until_ready((points, objects))
    print("KERNEL_OK")
</pallas_src>

<mosaic_0001>
module attributes {stable_mosaic.version = 11 : i64} {
  func.func @_head_kernel(%arg0: i32, %arg1: i32, %arg2: memref<1x3x256xf32, #tpu.memory_space<vmem>>, %arg3: memref<16x3xf32, #tpu.memory_space<vmem>>, %arg4: memref<16x128xf32, #tpu.memory_space<vmem>>, %arg5: memref<8x16xf32, #tpu.memory_space<vmem>>, %arg6: memref<8x128xf32, #tpu.memory_space<vmem>>, %arg7: memref<1x8x256xf32, #tpu.memory_space<vmem>>) attributes {dimension_semantics = [#tpu.dimension_semantics<parallel>, #tpu.dimension_semantics<parallel>], iteration_bounds = array<i64: 2, 1>, scalar_prefetch = 0 : i64, scratch_operands = 0 : i64, tpu.core_type = #tpu.core_type<tc>, window_params = [{transform_indices = @transform_0, window_bounds = array<i64: 1, 3, 256>}, {pipeline_mode = #tpu.pipeline_mode<synchronous>, transform_indices = @transform_1, window_bounds = array<i64: 16, 3>}, {pipeline_mode = #tpu.pipeline_mode<synchronous>, transform_indices = @transform_2, window_bounds = array<i64: 16, 128>}, {pipeline_mode = #tpu.pipeline_mode<synchronous>, transform_indices = @transform_3, window_bounds = array<i64: 8, 16>}, {pipeline_mode = #tpu.pipeline_mode<synchronous>, transform_indices = @transform_4, window_bounds = array<i64: 8, 128>}, {transform_indices = @transform_5, window_bounds = array<i64: 1, 8, 256>}]} {
    %c0 = arith.constant 0 : index
    %c0_0 = arith.constant 0 : index
    %c0_1 = arith.constant 0 : index
    %0 = vector.load %arg2[%c0, %c0_0, %c0_1] : memref<1x3x256xf32, #tpu.memory_space<vmem>>, vector<1x3x256xf32>
    %1 = vector.shape_cast %0 : vector<1x3x256xf32> to vector<3x256xf32>
    %c0_2 = arith.constant 0 : index
    %c0_3 = arith.constant 0 : index
    %2 = vector.load %arg3[%c0_2, %c0_3] : memref<16x3xf32, #tpu.memory_space<vmem>>, vector<16x3xf32>
    %c0_4 = arith.constant 0 : index
    %c0_5 = arith.constant 0 : index
    %3 = vector.load %arg4[%c0_4, %c0_5] : memref<16x128xf32, #tpu.memory_space<vmem>>, vector<16x128xf32>
    %4 = vector.extract_strided_slice %3 {offsets = [0, 0], sizes = [16, 1], strides = [1, 1]} : vector<16x128xf32> to vector<16x1xf32>
    %c0_6 = arith.constant 0 : index
    %c0_7 = arith.constant 0 : index
    %5 = vector.load %arg5[%c0_6, %c0_7] : memref<8x16xf32, #tpu.memory_space<vmem>>, vector<8x16xf32>
    %c0_8 = arith.constant 0 : index
    %c0_9 = arith.constant 0 : index
    %6 = vector.load %arg6[%c0_8, %c0_9] : memref<8x128xf32, #tpu.memory_space<vmem>>, vector<8x128xf32>
    %7 = vector.extract_strided_slice %6 {offsets = [0, 0], sizes = [8, 1], strides = [1, 1]} : vector<8x128xf32> to vector<8x1xf32>
    %cst = arith.constant dense<0.000000e+00> : vector<16x256xf32>
    %8 = tpu.matmul %2, %1, %cst {dimension_numbers = #tpu.dot_dimension_numbers<[1], [0], [0], [1], [0, 0, 1, 1], [], []>} : vector<16x3xf32>, vector<3x256xf32>, vector<16x256xf32> -> vector<16x256xf32>
    %9 = vector.broadcast %4 : vector<16x1xf32> to vector<16x256xf32>
    %10 = arith.addf %8, %9 : vector<16x256xf32>
    %cst_10 = arith.constant 0.000000e+00 : f32
    %11 = vector.broadcast %cst_10 : f32 to vector<16x256xf32>
    %12 = arith.maximumf %10, %11 : vector<16x256xf32>
    %cst_11 = arith.constant dense<0.000000e+00> : vector<8x256xf32>
    %13 = tpu.matmul %5, %12, %cst_11 {dimension_numbers = #tpu.dot_dimension_numbers<[1], [0], [0], [1], [0, 0, 1, 1], [], []>} : vector<8x16xf32>, vector<16x256xf32>, vector<8x256xf32> -> vector<8x256xf32>
    %14 = vector.broadcast %7 : vector<8x1xf32> to vector<8x256xf32>
    %15 = arith.addf %13, %14 : vector<8x256xf32>
    %16 = tpu.iota {dimensions = array<i32: 0>} : vector<8x256xi32>
    %c4_i32 = arith.constant 4 : i32
    %17 = vector.broadcast %c4_i32 : i32 to vector<8x256xi32>
    %18 = arith.cmpi slt, %16, %17 : vector<8x256xi32>
    %19 = arith.negf %15 : vector<8x256xf32>
    %20 = math.exp %19 : vector<8x256xf32>
    %cst_12 = arith.constant 1.000000e+00 : f32
    %21 = vector.broadcast %cst_12 : f32 to vector<8x256xf32>
    %22 = arith.addf %21, %20 : vector<8x256xf32>
    %23 = arith.divf %21, %22 : vector<8x256xf32>
    %24 = arith.select %18, %23, %15 : vector<8x256xi1>, vector<8x256xf32>
    %c0_13 = arith.constant 0 : index
    %c0_14 = arith.constant 0 : index
    %c0_15 = arith.constant 0 : index
    %25 = vector.load %arg7[%c0_13, %c0_14, %c0_15] : memref<1x8x256xf32, #tpu.memory_space<vmem>>, vector<1x8x256xf32>
    %26 = vector.shape_cast %25 : vector<1x8x256xf32> to vector<8x256xf32>
    %27 = vector.shape_cast %24 : vector<8x256xf32> to vector<1x8x256xf32>
    tpu.vector_store %arg7[%c0_13, %c0_14, %c0_15], %27 {strides = array<i32>} : memref<1x8x256xf32, #tpu.memory_space<vmem>>, vector<1x8x256xf32>,
    return
  }
  func.func @transform_0(%arg0: i32, %arg1: i32) -> (i32, i32, i32) {
    %c0_i32 = arith.constant 0 : i32
    %c0_i32_0 = arith.constant 0 : i32
    return %arg0, %c0_i32, %arg1 : i32, i32, i32
  }
  func.func @transform_1(%arg0: i32, %arg1: i32) -> (i32, i32) {
    %c0_i32 = arith.constant 0 : i32
    %c0_i32_0 = arith.constant 0 : i32
    %c0_i32_1 = arith.constant 0 : i32
    return %c0_i32, %c0_i32_0 : i32, i32
  }
  func.func @transform_2(%arg0: i32, %arg1: i32) -> (i32, i32) {
    %c0_i32 = arith.constant 0 : i32
    %c0_i32_0 = arith.constant 0 : i32
    %c0_i32_1 = arith.constant 0 : i32
    return %c0_i32, %c0_i32_0 : i32, i32
  }
  func.func @transform_3(%arg0: i32, %arg1: i32) -> (i32, i32) {
    %c0_i32 = arith.constant 0 : i32
    %c0_i32_0 = arith.constant 0 : i32
    %c0_i32_1 = arith.constant 0 : i32
    return %c0_i32, %c0_i32_0 : i32, i32
  }
  func.func @transform_4(%arg0: i32, %arg1: i32) -> (i32, i32) {
    %c0_i32 = arith.constant 0 : i32
    %c0_i32_0 = arith.constant 0 : i32
    %c0_i32_1 = arith.constant 0 : i32
    return %c0_i32, %c0_i32_0 : i32, i32
  }
  func.func @transform_5(%arg0: i32, %arg1: i32) -> (i32, i32, i32) {
    %c0_i32 = arith.constant 0 : i32
    %c0_i32_0 = arith.constant 0 : i32
    return %arg0, %c0_i32, %arg1 : i32, i32, i32
  }
}

</mosaic_0001>

<llo_original>
// kernel: _lambda_.1
$region0: #{_lambda_.1}
  #allocation0 [shape = 'u32[]', space=smem, size = 0x4, offset = 0x4, fixed_abs, tag = 'smem constant byte address 0x4 - core index']
  #allocation1 [shape = 'u32[144,128]{1,0:T(1,128)}', space=vmem, size = 0x12000, scoped, tag = 'internal scratch']
  %s0 = inlined_call_operand.vmem [shape: f32[2,3,256], index: 0, kind: input, shape index: {}]
  %s1 = inlined_call_operand.vmem [shape: f32[16,3], index: 1, kind: input, shape index: {}]
  %s2 = inlined_call_operand.vmem [shape: f32[16,128], index: 2, kind: input, shape index: {}]
  %s3 = inlined_call_operand.vmem [shape: f32[8,16], index: 3, kind: input, shape index: {}]
  %s4 = inlined_call_operand.vmem [shape: f32[8,128], index: 4, kind: input, shape index: {}]
  %s5 = inlined_call_operand.vmem [shape: f32[2,8,256], index: 5, kind: output, shape index: {}]
  %s6 = sld [smem:[#allocation0]]
  $region53: #{_lambda_.1} parent=0
    _
  %s8 = ssub.s32 1, %s6
  %s9 = scalar_select 0, %s8, %s6
  loop: start=0, step=1, limit=4
  $region2: #{_lambda_.1} parent=0 // loop_pre_header
    _
  $region3: #{_lambda_.1} parent=0 // loop_header
    %s11 = sphi 0, %s15
    %p12 = scmp.ge.s32.totalorder %s11, 4
    %s18 = sphi 0, %s30
    %s19 = sphi 0, %s26
    %s20 = sphi 0, %s18
    %s21 = sphi 0, %s19
    %s22 = sphi 0, %s20
    %s23 = sphi 0, %s21
    %s35 = sphi 0, %s37
    %s38 = sphi 0, %s35
    %s39 = sphi 0, %s38
    %s55 = sphi 0, %s39
    %s59 = sphi 0, %s59
    %s61 = sphi 0, %s59
    %s62 = sphi 0, %s61
    %s76 = sphi 0, %s62
    %s80 = sphi 0, %s80
    %s82 = sphi 0, %s80
    %s83 = sphi 0, %s82
    %s97 = sphi 0, %s83
    %s101 = sphi 0, %s101
    %s103 = sphi 0, %s101
    %s104 = sphi 0, %s103
    %s118 = sphi 0, %s104
    %s122 = sphi 0, %s122
    %s124 = sphi 0, %s122
    %s125 = sphi 0, %s124
    %s139 = sphi 0, %s125
    %s147 = sphi 0, %s149
    %s150 = sphi 0, %s147
    %s151 = sphi 0, %s150
    %s167 = sphi 0, %s151
  $region4: #{_lambda_.1} parent=0 // loop_header_branch
    %14 = sbr.rel (%p12) target = $region8
  $region5: #{_lambda_.1} parent=0 // loop_body
    %s16 = ssub.s32 %s11, 1
    %s17 = ssub.s32 %s11, 2
    %s24 = sadd.s32 1, %s19
    %p25 = scmp.ge.s32.totalorder %s24, 1
    %s26 = scalar_select %p25, 0, %s24
    %s27 = sadd.s32 1, %s18
    %s28 = scalar_select %p25, %s27, %s18
    %p29 = scmp.ge.s32.totalorder %s28, 2
    %s30 = scalar_select %p29, 0, %s28
    %s31 = ssub.s32 %s18, %s30
    %s32 = ssub.s32 %s19, %s26
    %s33 = sor.u32 %s31, %s32
    %p34 = scmp.eq.s32.totalorder %s33, 0
    %s36 = sadd.s32 %s35, 1
    %s37 = scalar_select %p34, %s35, %s36
    %p40 = pneg %p34
    %p41 = scmp.eq.s32.totalorder %s11, 1
    %p42 = por %p40, %p41
    %p43 = scmp.ne.s32.totalorder %s35, %s38
    %p44 = scmp.eq.s32.totalorder %s11, 0
    %p45 = por %p43, %p44
    %p46 = scmp.ne.s32.totalorder %s35, %s38
    %p47 = scmp.eq.s32.totalorder %s16, 1
    %p48 = por %p46, %p47
    %p49 = scmp.ne.s32.totalorder %s38, %s39
    %p50 = scmp.eq.s32.totalorder %s16, 0
    %p51 = por %p49, %p50
    %p52 = scmp.ne.s32.totalorder %s38, %s39
    %p53 = scmp.eq.s32.totalorder %s17, 1
    %p54 = por %p52, %p53
    %p56 = scmp.ne.s32.totalorder %s39, %s55
    %p57 = scmp.eq.s32.totalorder %s17, 0
    %p58 = por %p56, %p57
    %s60 = sadd.s32 %s59, 1
    %p63 = scmp.eq.s32.totalorder %s11, 1
    %p64 = scmp.ne.s32.totalorder %s59, %s61
    %p65 = scmp.eq.s32.totalorder %s11, 0
    %p66 = por %p64, %p65
    %p67 = scmp.ne.s32.totalorder %s59, %s61
    %p68 = scmp.eq.s32.totalorder %s16, 1
    %p69 = por %p67, %p68
    %p70 = scmp.ne.s32.totalorder %s61, %s62
    %p71 = scmp.eq.s32.totalorder %s16, 0
    %p72 = por %p70, %p71
    %p73 = scmp.ne.s32.totalorder %s61, %s62
    %p74 = scmp.eq.s32.totalorder %s17, 1
    %p75 = por %p73, %p74
    %p77 = scmp.ne.s32.totalorder %s62, %s76
    %p78 = scmp.eq.s32.totalorder %s17, 0
    %p79 = por %p77, %p78
    %s81 = sadd.s32 %s80, 1
    %p84 = scmp.eq.s32.totalorder %s11, 1
    %p85 = scmp.ne.s32.totalorder %s80, %s82
    %p86 = scmp.eq.s32.totalorder %s11, 0
    %p87 = por %p85, %p86
    %p88 = scmp.ne.s32.totalorder %s80, %s82
    %p89 = scmp.eq.s32.totalorder %s16, 1
    %p90 = por %p88, %p89
    %p91 = scmp.ne.s32.totalorder %s82, %s83
    %p92 = scmp.eq.s32.totalorder %s16, 0
    %p93 = por %p91, %p92
    %p94 = scmp.ne.s32.totalorder %s82, %s83
    %p95 = scmp.eq.s32.totalorder %s17, 1
    %p96 = por %p94, %p95
    %p98 = scmp.ne.s32.totalorder %s83, %s97
    %p99 = scmp.eq.s32.totalorder %s17, 0
    %p100 = por %p98, %p99
    %s102 = sadd.s32 %s101, 1
    %p105 = scmp.eq.s32.totalorder %s11, 1
    %p106 = scmp.ne.s32.totalorder %s101, %s103
    %p107 = scmp.eq.s32.totalorder %s11, 0
    %p108 = por %p106, %p107
    %p109 = scmp.ne.s32.totalorder %s101, %s103
    %p110 = scmp.eq.s32.totalorder %s16, 1
    %p111 = por %p109, %p110
    %p112 = scmp.ne.s32.totalorder %s103, %s104
    %p113 = scmp.eq.s32.totalorder %s16, 0
    %p114 = por %p112, %p113
    %p115 = scmp.ne.s32.totalorder %s103, %s104
    %p116 = scmp.eq.s32.totalorder %s17, 1
    %p117 = por %p115, %p116
    %p119 = scmp.ne.s32.totalorder %s104, %s118
    %p120 = scmp.eq.s32.totalorder %s17, 0
    %p121 = por %p119, %p120
    %s123 = sadd.s32 %s122, 1
    %p126 = scmp.eq.s32.totalorder %s11, 1
    %p127 = scmp.ne.s32.totalorder %s122, %s124
    %p128 = scmp.eq.s32.totalorder %s11, 0
    %p129 = por %p127, %p128
    %p130 = scmp.ne.s32.totalorder %s122, %s124
    %p131 = scmp.eq.s32.totalorder %s16, 1
    %p132 = por %p130, %p131
    %p133 = scmp.ne.s32.totalorder %s124, %s125
    %p134 = scmp.eq.s32.totalorder %s16, 0
    %p135 = por %p133, %p134
    %p136 = scmp.ne.s32.totalorder %s124, %s125
    %p137 = scmp.eq.s32.totalorder %s17, 1
    %p138 = por %p136, %p137
    %p140 = scmp.ne.s32.totalorder %s125, %s139
    %p141 = scmp.eq.s32.totalorder %s17, 0
    %p142 = por %p140, %p141
    %s143 = ssub.s32 %s18, %s30
    %s144 = ssub.s32 %s19, %s26
    %s145 = sor.u32 %s143, %s144
    %p146 = scmp.eq.s32.totalorder %s145, 0
    %s148 = sadd.s32 %s147, 1
    %s149 = scalar_select %p146, %s147, %s148
    %p152 = pneg %p146
    %p153 = scmp.eq.s32.totalorder %s11, 1
    %p154 = por %p152, %p153
    %p155 = scmp.ne.s32.totalorder %s147, %s150
    %p156 = scmp.eq.s32.totalorder %s11, 0
    %p157 = por %p155, %p156
    %p158 = scmp.ne.s32.totalorder %s147, %s150
    %p159 = scmp.eq.s32.totalorder %s16, 1
    %p160 = por %p158, %p159
    %p161 = scmp.ne.s32.totalorder %s150, %s151
    %p162 = scmp.eq.s32.totalorder %s16, 0
    %p163 = por %p161, %p162
    %p164 = scmp.ne.s32.totalorder %s150, %s151
    %p165 = scmp.eq.s32.totalorder %s17, 1
    %p166 = por %p164, %p165
    %p168 = scmp.ne.s32.totalorder %s151, %s167
    %p169 = scmp.eq.s32.totalorder %s17, 0
    %p170 = por %p168, %p169
    %p171 = scmp.le.s32.totalorder 1, %s11
    %p172 = scmp.lt.s32.totalorder %s11, 3
    %p173 = pnand %p171, %p172
    %p174 = pneg %p173
    // Predicated region
    $region9: #{_lambda_.1} parent=5 // pred_check
      _
    $region10: #{_lambda_.1} parent=5 // pred_check_branch
      %176 = sbr.rel (%p173) target = $region12
    $region11: #{_lambda_.1} parent=5 // pred_region
      %s177 = ssub.s32 %s11, 1
      // Predicated region
      $region13: #{_lambda_.1} parent=11 // pred_check
        %p178 = pneg %p72
      $region14: #{_lambda_.1} parent=11 // pred_check_branch
        %180 = sbr.rel (%p178) target = $region16
      $region15: #{_lambda_.1} parent=11 // pred_region
        _
      $region16: #{_lambda_.1} parent=11 // pred_fallthru
        _
      // Predicated region
      $region17: #{_lambda_.1} parent=11 // pred_check
        %p181 = pneg %p93
      $region18: #{_lambda_.1} parent=11 // pred_check_branch
        %183 = sbr.rel (%p181) target = $region20
      $region19: #{_lambda_.1} parent=11 // pred_region
        _
      $region20: #{_lambda_.1} parent=11 // pred_fallthru
        _
      // Predicated region
      $region21: #{_lambda_.1} parent=11 // pred_check
        %p184 = pneg %p114
      $region22: #{_lambda_.1} parent=11 // pred_check_branch
        %186 = sbr.rel (%p184) target = $region24
      $region23: #{_lambda_.1} parent=11 // pred_region
        _
      $region24: #{_lambda_.1} parent=11 // pred_fallthru
        _
      // Predicated region
      $region25: #{_lambda_.1} parent=11 // pred_check
        %p187 = pneg %p135
      $region26: #{_lambda_.1} parent=11 // pred_check_branch
        %189 = sbr.rel (%p187) target = $region28
      $region27: #{_lambda_.1} parent=11 // pred_region
        _
      $region28: #{_lambda_.1} parent=11 // pred_fallthru
        _
    $region12: #{_lambda_.1} parent=5 // pred_fallthru
      _
    %p190 = scmp.lt.s32.totalorder %s11, 2
    // Predicated region
    $region29: #{_lambda_.1} parent=5 // pred_check
      %p191 = pneg %p190
    $region30: #{_lambda_.1} parent=5 // pred_check_branch
      %193 = sbr.rel (%p191) target = $region32
    $region31: #{_lambda_.1} parent=5 // pred_region
      // Predicated region
      $region33: #{_lambda_.1} parent=31 // pred_check
        %p194 = pneg %p45
      $region34: #{_lambda_.1} parent=31 // pred_check_branch
        %196 = sbr.rel (%p194) target = $region36
      $region35: #{_lambda_.1} parent=31 // pred_region
        %s197 = smul.u32 2, %s19
        %p198 = scmp.lt.s32.totalorder %s18, 1
        %s199 = scalar_select %p198, %s18, 1
        %p200 = scmp.lt.s32.totalorder %s197, 1
        %s201 = scalar_select %p200, %s197, 1
        %s202 = smul.addr %s199, 2
        %s203 = sadd.s32 %s201, %s202
        %s204 = smul.addr %s203, 4
        %s205 = scalar_lea.vmem %s0, %s204
        %s206 = smul.u32 2, %s19
      $region36: #{_lambda_.1} parent=31 // pred_fallthru
        _
    $region32: #{_lambda_.1} parent=5 // pred_fallthru
      _
    %p207 = scmp.le.s32.totalorder 1, %s11
    %p208 = scmp.lt.s32.totalorder %s11, 3
    %p209 = pnand %p207, %p208
    %p210 = pneg %p209
    // Predicated region
    $region37: #{_lambda_.1} parent=5 // pred_check
      _
    $region38: #{_lambda_.1} parent=5 // pred_check_branch
      %212 = sbr.rel (%p209) target = $region40
    $region39: #{_lambda_.1} parent=5 // pred_region
      %s213 = ssub.s32 %s11, 1
      %s214 = smul.u32 2, %s21
      %p215 = scmp.lt.s32.totalorder %s20, 1
      %s216 = scalar_select %p215, %s20, 1
      %p217 = scmp.lt.s32.totalorder %s214, 1
      %s218 = scalar_select %p217, %s214, 1
      %s219 = smul.addr %s216, 2
      %s220 = sadd.s32 %s218, %s219
      %s221 = smul.addr %s220, 4
      %s222 = scalar_lea.vmem %s0, %s221
      %p223 = pneg %p51
      %p224 = pneg %p48
      %p225 = pneg %p72
      %p226 = pneg %p69
      %p227 = pneg %p93
      %p228 = pneg %p90
      %p229 = pneg %p114
      %p230 = pneg %p111
      %p231 = pneg %p135
      %p232 = pneg %p132
      %p233 = pneg %p163
      %p234 = pneg %p160
      %s235 = smul.u32 2, %s21
      %p236 = scmp.lt.s32.totalorder %s20, 1
      %s237 = scalar_select %p236, %s20, 1
      %p238 = scmp.lt.s32.totalorder %s235, 1
      %s239 = scalar_select %p238, %s235, 1
      %s240 = smul.addr %s237, 2
      %s241 = sadd.s32 %s239, %s240
      %s242 = smul.addr %s241, 8
      %s243 = scalar_lea.vmem %s5, %s242
      %s244 = smul.u32 2, %s21
      %p245 = scmp.lt.s32.totalorder %s20, 1
      %s246 = scalar_select %p245, %s20, 1
      %p247 = scmp.lt.s32.totalorder %s244, 1
      %s248 = scalar_select %p247, %s244, 1
      %s249 = smul.addr %s246, 2
      %s250 = sadd.s32 %s248, %s249
      %s251 = smul.addr %s250, 4
      %s252 = scalar_lea.vmem %s0, %s251
      %s253 = smul.u32 2, %s21
      %s254 = smul.u32 2, %s21
      %p255 = scmp.lt.s32.totalorder %s20, 1
      %s256 = scalar_select %p255, %s20, 1
      %p257 = scmp.lt.s32.totalorder %s254, 1
      %s258 = scalar_select %p257, %s254, 1
      %s259 = smul.addr %s256, 2
      %s260 = sadd.s32 %s258, %s259
      %s261 = smul.addr %s260, 8
      %s262 = scalar_lea.vmem %s5, %s261
      %s263 = smul.u32 2, %s21
      %v264 = vld [vmem:[%s252] sm:$0x77]
      %v265 = vld [vmem:[%s1] sm:$0xff]
      %v266 = vld [vmem:[%s1 + $0x8] sm:$0xff]
      %v267 = vld [vmem:[%s2] sm:$0xff]
      %v268 = vld [vmem:[%s2 + $0x8] sm:$0xff]
      %v269 = vld [vmem:[%s3] sm:$0xff]
      %v270 = vld [vmem:[%s4] sm:$0xff]
      %272 = vset.pattern.permute.xlu0 0
      %273 = vperm.xlu0 %272, %v267
      %v274 = vpop.permute.xlu0 %273
      %277 = vset.pattern.permute.xlu0 0
      %278 = vperm.xlu0 %277, %v268
      %v279 = vpop.permute.xlu0 %278
      %v282 = vcombine.high %v264, %v264
      %vm283 = vcmask 23552
      %v285 = vsel %vm283, %v265, 0
      %v288 = vsel %vm283, %v266, 0
      %vm290 = vcmask 1042432
      %v291 = vsel %vm290, %v264, 0
      %v293 = vsel %vm290, %v282, 0
      %295 = vmatprep.subr.mxu0 0.0
      %296 = vmatpush1.msra.mxu0 0.0
      %297 = vmatprep.subr.mxu0 0.0
      %298 = vmatpush1.msra.mxu0 0.0
      %299 = vmatprep.subr.mxu0 0.0
      %300 = vmatpush1.msra.mxu0 0.0
      %301 = vmatprep.subr.mxu0 0.0
      %302 = vmatpush1.msra.mxu0 0.0
      %303 = vmatprep.subr.mxu0 0.0
      %304 = vmatpush1.msra.mxu0 0.0
      %305 = vmatprep.subr.mxu0 0.0
      %306 = vmatpush1.msra.mxu0 0.0
      %307 = vmatprep.subr.mxu0 0.0
      %308 = vmatpush1.msra.mxu0 0.0
      %309 = vmatprep.subr.mxu0 0.0
      %310 = vmatpush1.msra.mxu0 0.0
      %311 = vmatprep.subr.mxu0 0.0
      %312 = vmatpush1.msra.mxu0 0.0
      %313 = vmatprep.subr.mxu0 0.0
      %314 = vmatpush1.msra.mxu0 0.0
      %315 = vmatprep.subr.mxu0 0.0
      %316 = vmatpush1.msra.mxu0 0.0
      %317 = vmatprep.subr.mxu0 0.0
      %318 = vmatpush1.msra.mxu0 0.0
      %319 = vmatprep.subr.mxu0 0.0
      %320 = vmatpush1.msra.mxu0 0.0
      %321 = vmatprep.subr.mxu0 0.0
      %322 = vmatpush1.msra.mxu0 0.0
      %323 = vmatprep.subr.mxu0 0.0
      %324 = vmatpush1.msra.mxu0 0.0
      %325 = vmatprep.subr.mxu0 %v293
      %326 = vmatpush1.msra.mxu0 %v291
      %327 = vmatprep.subr.mxu0 0.0
      %328 = vmatpush2.msra.mxu0 0.0
      %329 = vmatprep.subr.mxu0 0.0
      %330 = vmatpush2.msra.mxu0 0.0
      %331 = vmatprep.subr.mxu0 0.0
      %332 = vmatpush2.msra.mxu0 0.0
      %333 = vmatprep.subr.mxu0 0.0
      %334 = vmatpush2.msra.mxu0 0.0
      %335 = vmatprep.subr.mxu0 0.0
      %336 = vmatpush2.msra.mxu0 0.0
      %337 = vmatprep.subr.mxu0 0.0
      %338 = vmatpush2.msra.mxu0 0.0
      %339 = vmatprep.subr.mxu0 0.0
      %340 = vmatpush2.msra.mxu0 0.0
      %341 = vmatprep.subr.mxu0 0.0
      %342 = vmatpush2.msra.mxu0 0.0
      %343 = vmatprep.subr.mxu0 0.0
      %344 = vmatpush2.msra.mxu0 0.0
      %345 = vmatprep.subr.mxu0 0.0
      %346 = vmatpush2.msra.mxu0 0.0
      %347 = vmatprep.subr.mxu0 0.0
      %348 = vmatpush2.msra.mxu0 0.0
      %349 = vmatprep.subr.mxu0 0.0
      %350 = vmatpush2.msra.mxu0 0.0
      %351 = vmatprep.subr.mxu0 0.0
      %352 = vmatpush2.msra.mxu0 0.0
      %353 = vmatprep.subr.mxu0 0.0
      %354 = vmatpush2.msra.mxu0 0.0
      %355 = vmatprep.subr.mxu0 0.0
      %356 = vmatpush2.msra.mxu0 0.0
      %357 = vmatprep.subr.mxu0 0.0
      %358 = vmatpush2.msra.mxu0 0.0
      %359 = vmatprep.mubr.f32.mxu0 0.0
      %360 = vmatmul.mubr.f32.gmra.mxu0 %v285
      %v361 = vpop.f32.mrf.mxu0
      %v362 = vadd.f32 %v274, %v361
      %v363 = vpop.f32.mrf.mxu0
      %v364 = vadd.f32 %v274, %v363
      %365 = vmatprep.mubr.f32.mxu0 0.0
      %366 = vmatmul.mubr.f32.gmra.mxu0 %v288
      %v367 = vpop.f32.mrf.mxu0
      %v368 = vadd.f32 %v279, %v367
      %v369 = vpop.f32.mrf.mxu0
      %v370 = vadd.f32 %v279, %v369
      %371 = vdwg.mxu0
      %v372 = vmax.f32 %v362, 0.0
      %v373 = vmax.f32 %v364, 0.0
      %v374 = vmax.f32 %v368, 0.0
      %v375 = vmax.f32 %v370, 0.0
      %377 = vset.pattern.permute.xlu0 0
      %378 = vperm.xlu0 %377, %v270
      %v379 = vpop.permute.xlu0 %378
      %vm381 = vcmask 130048
      %v383 = vsel %vm381, %v269, 0
      %385 = vmatprep.subr.mxu0 0.0
      %386 = vmatpush1.msra.mxu0 0.0
      %387 = vmatprep.subr.mxu0 0.0
      %388 = vmatpush1.msra.mxu0 0.0
      %389 = vmatprep.subr.mxu0 0.0
      %390 = vmatpush1.msra.mxu0 0.0
      %391 = vmatprep.subr.mxu0 0.0
      %392 = vmatpush1.msra.mxu0 0.0
      %393 = vmatprep.subr.mxu0 0.0
      %394 = vmatpush1.msra.mxu0 0.0
      %395 = vmatprep.subr.mxu0 0.0
      %396 = vmatpush1.msra.mxu0 0.0
      %397 = vmatprep.subr.mxu0 0.0
      %398 = vmatpush1.msra.mxu0 0.0
      %399 = vmatprep.subr.mxu0 0.0
      %400 = vmatpush1.msra.mxu0 0.0
      %401 = vmatprep.subr.mxu0 0.0
      %402 = vmatpush1.msra.mxu0 0.0
      %403 = vmatprep.subr.mxu0 0.0
      %404 = vmatpush1.msra.mxu0 0.0
      %405 = vmatprep.subr.mxu0 0.0
      %406 = vmatpush1.msra.mxu0 0.0
      %407 = vmatprep.subr.mxu0 0.0
      %408 = vmatpush1.msra.mxu0 0.0
      %409 = vmatprep.subr.mxu0 0.0
      %410 = vmatpush1.msra.mxu0 0.0
      %411 = vmatprep.subr.mxu0 0.0
      %412 = vmatpush1.msra.mxu0 0.0
      %413 = vmatprep.subr.mxu0 %v375
      %414 = vmatpush1.msra.mxu0 %v374
      %415 = vmatprep.subr.mxu0 %v373
      %416 = vmatpush1.msra.mxu0 %v372
      %417 = vmatprep.subr.mxu0 0.0
      %418 = vmatpush2.msra.mxu0 0.0
      %419 = vmatprep.subr.mxu0 0.0
      %420 = vmatpush2.msra.mxu0 0.0
      %421 = vmatprep.subr.mxu0 0.0
      %422 = vmatpush2.msra.mxu0 0.0
      %423 = vmatprep.subr.mxu0 0.0
      %424 = vmatpush2.msra.mxu0 0.0
      %425 = vmatprep.subr.mxu0 0.0
      %426 = vmatpush2.msra.mxu0 0.0
      %427 = vmatprep.subr.mxu0 0.0
      %428 = vmatpush2.msra.mxu0 0.0
      %429 = vmatprep.subr.mxu0 0.0
      %430 = vmatpush2.msra.mxu0 0.0
      %431 = vmatprep.subr.mxu0 0.0
      %432 = vmatpush2.msra.mxu0 0.0
      %433 = vmatprep.subr.mxu0 0.0
      %434 = vmatpush2.msra.mxu0 0.0
      %435 = vmatprep.subr.mxu0 0.0
      %436 = vmatpush2.msra.mxu0 0.0
      %437 = vmatprep.subr.mxu0 0.0
      %438 = vmatpush2.msra.mxu0 0.0
      %439 = vmatprep.subr.mxu0 0.0
      %440 = vmatpush2.msra.mxu0 0.0
      %441 = vmatprep.subr.mxu0 0.0
      %442 = vmatpush2.msra.mxu0 0.0
      %443 = vmatprep.subr.mxu0 0.0
      %444 = vmatpush2.msra.mxu0 0.0
      %445 = vmatprep.subr.mxu0 0.0
      %446 = vmatpush2.msra.mxu0 0.0
      %447 = vmatprep.subr.mxu0 0.0
      %448 = vmatpush2.msra.mxu0 0.0
      %449 = vmatprep.mubr.f32.mxu0 0.0
      %450 = vmatmul.mubr.f32.gmra.mxu0 %v383
      %v451 = vpop.f32.mrf.mxu0
      %v452 = vadd.f32 %v379, %v451
      %v453 = vpop.f32.mrf.mxu0
      %v454 = vadd.f32 %v379, %v453
      %455 = vdwg.mxu0
      %v456 = vlaneseq
      %v457 = vshrl.u32 %v456, 7
      %vm458 = vcmp.lt.s32.totalorder %v457, 4
      %v459 = vxor.u32 %v452, 2147483648
      %v460 = vxor.u32 %v454, 2147483648
      %v461 = vmul.f32 %v459, 1.442695
      %v462 = vpow.pop %v461
      %v463 = vmul.f32 %v460, 1.442695
      %v464 = vpow.pop %v463
      %v465 = vadd.f32 %v462, 1.0
      %v466 = vadd.f32 %v464, 1.0
      %v467 = vrcp.pop %v465
      %v468 = vmul.f32 1.0, %v467
      %v469 = vrcp.pop %v466
      %v470 = vmul.f32 1.0, %v469
      %v471 = vsel %vm458, %v468, %v452
      %v472 = vsel %vm458, %v470, %v454
      %473 = vst [vmem:[%s262] sm:$0xff] %v471
      %474 = vst [vmem:[%s262 + $0x8] sm:$0xff] %v472
      %s475 = smul.u32 2, %s21
      %p476 = scmp.lt.s32.totalorder %s20, 1
      %s477 = scalar_select %p476, %s20, 1
      %p478 = scmp.lt.s32.totalorder %s475, 1
      %s479 = scalar_select %p478, %s475, 1
      %s480 = smul.addr %s477, 2
      %s481 = sadd.s32 %s479, %s480
      %s482 = smul.addr %s481, 8
      %s483 = scalar_lea.vmem %s5, %s482
      // Predicated region
      $region41: #{_lambda_.1} parent=39 // pred_check
        %p484 = pneg %p160
      $region42: #{_lambda_.1} parent=39 // pred_check_branch
        %486 = sbr.rel (%p484) target = $region44
      $region43: #{_lambda_.1} parent=39 // pred_region
        %s487 = smul.u32 2, %s21
      $region44: #{_lambda_.1} parent=39 // pred_fallthru
        _
    $region40: #{_lambda_.1} parent=5 // pred_fallthru
      _
    %p488 = scmp.le.s32.totalorder 2, %s11
    // Predicated region
    $region45: #{_lambda_.1} parent=5 // pred_check
      %p489 = pneg %p488
    $region46: #{_lambda_.1} parent=5 // pred_check_branch
      %491 = sbr.rel (%p489) target = $region48
    $region47: #{_lambda_.1} parent=5 // pred_region
      %s492 = ssub.s32 %s11, 2
      // Predicated region
      $region49: #{_lambda_.1} parent=47 // pred_check
        %p493 = pneg %p166
      $region50: #{_lambda_.1} parent=47 // pred_check_branch
        %495 = sbr.rel (%p493) target = $region52
      $region51: #{_lambda_.1} parent=47 // pred_region
        %s496 = smul.u32 2, %s23
        %p497 = scmp.lt.s32.totalorder %s22, 1
        %s498 = scalar_select %p497, %s22, 1
        %p499 = scmp.lt.s32.totalorder %s496, 1
        %s500 = scalar_select %p499, %s496, 1
        %s501 = smul.addr %s498, 2
        %s502 = sadd.s32 %s500, %s501
        %s503 = smul.addr %s502, 8
        %s504 = scalar_lea.vmem %s5, %s503
      $region52: #{_lambda_.1} parent=47 // pred_fallthru
        _
    $region48: #{_lambda_.1} parent=5 // pred_fallthru
      _
  $region6: #{_lambda_.1} parent=0 // loop_footer
    %s15 = sadd.s32 1, %s11
  $region7: #{_lambda_.1} parent=0 // loop_footer_branch
    %10 = sbr.rel target = $region3
  $region8: #{_lambda_.1} parent=0 // loop_exit
    _

</llo_original>
